<compile_context>
chip_gen: v5e
topology: v5e:2x2
jax: 0.10.0
libtpu: 0.0.40
codegen_flags: <defaults>
</compile_context>

<pallas_src>
import jax
import jax.numpy as jnp
from jax.experimental import pallas as pl
from jax.experimental.pallas import tpu as pltpu

EPS = 1e-5  # nn.BatchNorm2d default


# ---------------------------------------------------------------------------
# Parameter prep (XLA, trace-time)
# ---------------------------------------------------------------------------
def _band_weights(w_hwio, W):
    """(3, 3, Cin, Cout) -> (3, W*Cin, W*Cout) banded matrices.

    wb[kh][wi*Cin + ci, wo*Cout + co] = w[kh, wi - wo + 1, ci, co] when
    |wi - wo| <= 1, else 0.  The kw taps and the W-direction zero padding are
    folded into the weight, so the conv kernel needs no lane shifts at all.
    """
    _, _, Cin, Cout = w_hwio.shape
    wb = jnp.zeros((3, W * Cin, W * Cout), w_hwio.dtype)
    for kw in range(3):
        for wo in range(W):
            wi = wo + kw - 1
            if 0 <= wi < W:
                wb = wb.at[:, wi * Cin:(wi + 1) * Cin,
                           wo * Cout:(wo + 1) * Cout].set(w_hwio[:, kw])
    return wb


# ---------------------------------------------------------------------------
# Fused kernel
# ---------------------------------------------------------------------------
def _make_fused_kernel(N, H, W, Cin, Cout):
    WCi, WCo = W * Cin, W * Cout
    inv_count = 1.0 / float(N * H * W)   # training-mode BN count per channel

    def kernel(x_ref, wb1_ref, wb2_ref, gmat_ref,
               g1_ref, b1_ref, g2_ref, b2_ref, o_ref, pad_ref):

        def conv3x3(v, wb_ref):
            """3x3 conv: per kh tap one (N*H, W*Cin) x (W*Cin, W*Cout) MXU
            matmul (bf16 operands, f32 accumulation).  kw taps + W-boundary
            zeros live in the banded weight; H halo = 2 zero rows in the
            VMEM scratch (only the halo rows are zeroed)."""
            zrow = jnp.zeros((N, 1, WCi), jnp.float32)
            pad_ref[:, 0:1, :] = zrow
            pad_ref[:, H + 1:H + 2, :] = zrow
            pad_ref[:, 1:H + 1, :] = v
            acc = jnp.zeros((N * H, WCo), jnp.float32)
            for kh in range(3):        # unrolled: sublane-shifted reads only
                lhs = pad_ref[:, kh:kh + H, :].reshape(N * H, WCi)
                acc = acc + jnp.dot(lhs.astype(jnp.bfloat16), wb_ref[kh],
                                    preferred_element_type=jnp.float32)
            return acc

        def bn_affine(y2d, g_ref, b_ref):
            """Exact training-mode BN (biased variance) over the resident
            batch.  Per-channel fold + re-tile to the lane-dense (1, W*C)
            layout is a single tiny MXU matmul vs the 0/1 group matrix."""
            s = jnp.sum(y2d, axis=0, keepdims=True)            # (1, WCo)
            ss = jnp.sum(y2d * y2d, axis=0, keepdims=True)     # (1, WCo)
            s_ch = jnp.dot(s, gmat_ref[...],
                           preferred_element_type=jnp.float32)
            ss_ch = jnp.dot(ss, gmat_ref[...],
                            preferred_element_type=jnp.float32)
            mean = s_ch * inv_count
            var = ss_ch * inv_count - mean * mean
            scale = g_ref[...] * jax.lax.rsqrt(var + EPS)
            shift = b_ref[...] - mean * scale
            return scale, shift

        x = x_ref[...]                                         # (N, H, WCi)

        # conv1 -> BN1 -> ReLU
        y1 = conv3x3(x, wb1_ref)                               # (N*H, WCo)
        sc1, sh1 = bn_affine(y1, g1_ref, b1_ref)
        a = jnp.maximum(y1 * sc1 + sh1, 0.0).reshape(N, H, WCo)

        # conv2 -> BN2 -> +identity -> ReLU (single HBM writeback)
        y2 = conv3x3(a, wb2_ref)
        sc2, sh2 = bn_affine(y2, g2_ref, b2_ref)
        o_ref[...] = jnp.maximum(
            (y2 * sc2 + sh2).reshape(N, H, WCo) + x, 0.0)

    return kernel


# ---------------------------------------------------------------------------
# Wrapper
# ---------------------------------------------------------------------------
def basic_block(x_nhwc, w1_hwio, g1, b1, w2_hwio, g2, b2):
    """BasicBlock forward.  x_nhwc: (N,H,W,Cin) f32; w*_hwio: (3,3,Cin,Cout);
    g*/b*: (Cout,)."""
    N, H, W, Cin = x_nhwc.shape
    Cout = w1_hwio.shape[-1]
    assert Cin == Cout, "identity residual requires inplanes == planes"
    WCi, WCo = W * Cin, W * Cout

    # Lane-dense fold NHWC -> (N, H, W*C): last dim is 128 here (free reshape).
    x_f = x_nhwc.reshape(N, H, WCi)

    # bf16 banded weights (MXU-native rate, half the weight DMA/VMEM).
    wb1 = _band_weights(w1_hwio, W).astype(jnp.bfloat16)
    wb2 = _band_weights(w2_hwio, W).astype(jnp.bfloat16)

    # 0/1 channel-group matrix: gmat[i, j] = (i % C == j % C).
    lane = jnp.arange(WCo)
    gmat = (lane[:, None] % Cout == lane[None, :] % Cout).astype(jnp.float32)

    # gamma/beta tiled to the folded (1, W*C) lane layout.
    g1t = jnp.tile(g1, W).reshape(1, WCo)
    b1t = jnp.tile(b1, W).reshape(1, WCo)
    g2t = jnp.tile(g2, W).reshape(1, WCo)
    b2t = jnp.tile(b2, W).reshape(1, WCo)

    kernel = _make_fused_kernel(N, H, W, Cin, Cout)

    out_f = pl.pallas_call(
        kernel,
        out_shape=jax.ShapeDtypeStruct((N, H, WCo), jnp.float32),
        scratch_shapes=[pltpu.VMEM((N, H + 2, WCi), jnp.float32)],
        compiler_params=pltpu.CompilerParams(
            vmem_limit_bytes=32 * 1024 * 1024),
    )(x_f, wb1, wb2, gmat, g1t, b1t, g2t, b2t)

    return out_f.reshape(N, H, W, Cout)


# ---------------------------------------------------------------------------
# Pure-JAX reference (matches torch: conv3x3 -> BN(train) -> ReLU -> conv3x3
# -> BN(train) -> +identity -> ReLU)
# ---------------------------------------------------------------------------
def _reference(x_nhwc, w1_hwio, g1, b1, w2_hwio, g2, b2):
    def conv(x, w):
        return jax.lax.conv_general_dilated(
            x, w, window_strides=(1, 1), padding="SAME",
            dimension_numbers=("NHWC", "HWIO", "NHWC"))

    def bn(x, g, b):
        m = jnp.mean(x, axis=(0, 1, 2), keepdims=True)
        v = jnp.mean((x - m) ** 2, axis=(0, 1, 2), keepdims=True)
        return (x - m) * jax.lax.rsqrt(v + EPS) * g.reshape(1, 1, 1, -1) \
            + b.reshape(1, 1, 1, -1)

    out = jnp.maximum(bn(conv(x_nhwc, w1_hwio), g1, b1), 0.0)
    out = bn(conv(out, w2_hwio), g2, b2)
    return jnp.maximum(out + x_nhwc, 0.0)


if __name__ == "__main__":
    # BasicBlock(inplanes=8, planes=8, stride=1, downsample=None)
    N, C, H, W = 2, 8, 16, 16
    key = jax.random.PRNGKey(0)
    kx, kw1, kw2, kg1, kb1, kg2, kb2 = jax.random.split(key, 7)

    # PyTorch-native layouts for parameter init, then transpose for the kernel.
    x_nchw = jax.random.normal(kx, (N, C, H, W), jnp.float32)
    w1_oihw = 0.1 * jax.random.normal(kw1, (C, C, 3, 3), jnp.float32)
    w2_oihw = 0.1 * jax.random.normal(kw2, (C, C, 3, 3), jnp.float32)
    gamma1 = 1.0 + 0.1 * jax.random.normal(kg1, (C,), jnp.float32)
    beta1 = 0.1 * jax.random.normal(kb1, (C,), jnp.float32)
    gamma2 = 1.0 + 0.1 * jax.random.normal(kg2, (C,), jnp.float32)
    beta2 = 0.1 * jax.random.normal(kb2, (C,), jnp.float32)

    x_nhwc = jnp.transpose(x_nchw, (0, 2, 3, 1))          # NCHW -> NHWC
    w1_hwio = jnp.transpose(w1_oihw, (2, 3, 1, 0))         # OIHW -> HWIO
    w2_hwio = jnp.transpose(w2_oihw, (2, 3, 1, 0))

    out = jax.jit(basic_block)(x_nhwc, w1_hwio, gamma1, beta1,
                               w2_hwio, gamma2, beta2)
    out = jax.block_until_ready(out)

    ref = jax.block_until_ready(
        _reference(x_nhwc, w1_hwio, gamma1, beta1, w2_hwio, gamma2, beta2))
    assert out.shape == (N, H, W, C)
    # bf16 MXU operands (f32 accumulation) -> relaxed tolerance vs f32 ref.
    err = float(jnp.max(jnp.abs(out - ref)))
    assert jnp.allclose(out, ref, atol=5e-2, rtol=5e-2), err

    print("KERNEL_OK")
</pallas_src>

<mosaic_0001>
module attributes {stable_mosaic.version = 11 : i64} {
  func.func @kernel(%arg0: memref<2x16x128xf32, #tpu.memory_space<vmem>>, %arg1: memref<3x128x128xbf16, #tpu.memory_space<vmem>>, %arg2: memref<3x128x128xbf16, #tpu.memory_space<vmem>>, %arg3: memref<128x128xf32, #tpu.memory_space<vmem>>, %arg4: memref<1x128xf32, #tpu.memory_space<vmem>>, %arg5: memref<1x128xf32, #tpu.memory_space<vmem>>, %arg6: memref<1x128xf32, #tpu.memory_space<vmem>>, %arg7: memref<1x128xf32, #tpu.memory_space<vmem>>, %arg8: memref<2x16x128xf32, #tpu.memory_space<vmem>>, %arg9: memref<2x18x128xf32, #tpu.memory_space<vmem>>) attributes {dimension_semantics = [], scalar_prefetch = 0 : i64, scratch_operands = 1 : i64, tpu.core_type = #tpu.core_type<tc>} {
    %c0 = arith.constant 0 : index
    %c0_0 = arith.constant 0 : index
    %c0_1 = arith.constant 0 : index
    %0 = vector.load %arg0[%c0, %c0_0, %c0_1] : memref<2x16x128xf32, #tpu.memory_space<vmem>>, vector<2x16x128xf32>
    %cst = arith.constant 0.000000e+00 : f32
    %1 = vector.broadcast %cst : f32 to vector<2x1x128xf32>
    %c0_2 = arith.constant 0 : index
    %c0_3 = arith.constant 0 : index
    %c0_4 = arith.constant 0 : index
    %2 = vector.load %arg9[%c0_2, %c0_3, %c0_4] : memref<2x18x128xf32, #tpu.memory_space<vmem>>, vector<2x1x128xf32>
    tpu.vector_store %arg9[%c0_2, %c0_3, %c0_4], %1 {strides = array<i32>} : memref<2x18x128xf32, #tpu.memory_space<vmem>>, vector<2x1x128xf32>,
    %c0_5 = arith.constant 0 : index
    %c17 = arith.constant 17 : index
    %c0_6 = arith.constant 0 : index
    %3 = vector.load %arg9[%c0_5, %c17, %c0_6] : memref<2x18x128xf32, #tpu.memory_space<vmem>>, vector<2x1x128xf32>
    tpu.vector_store %arg9[%c0_5, %c17, %c0_6], %1 {strides = array<i32>} : memref<2x18x128xf32, #tpu.memory_space<vmem>>, vector<2x1x128xf32>,
    %c0_7 = arith.constant 0 : index
    %c1 = arith.constant 1 : index
    %c0_8 = arith.constant 0 : index
    %4 = vector.load %arg9[%c0_7, %c1, %c0_8] : memref<2x18x128xf32, #tpu.memory_space<vmem>>, vector<2x16x128xf32>
    tpu.vector_store %arg9[%c0_7, %c1, %c0_8], %0 {strides = array<i32>} : memref<2x18x128xf32, #tpu.memory_space<vmem>>, vector<2x16x128xf32>,
    %cst_9 = arith.constant 0.000000e+00 : f32
    %5 = vector.broadcast %cst_9 : f32 to vector<32x128xf32>
    %c0_10 = arith.constant 0 : index
    %c0_11 = arith.constant 0 : index
    %c0_12 = arith.constant 0 : index
    %6 = vector.load %arg9[%c0_10, %c0_11, %c0_12] : memref<2x18x128xf32, #tpu.memory_space<vmem>>, vector<2x16x128xf32>
    %7 = vector.shape_cast %6 : vector<2x16x128xf32> to vector<32x128xf32>
    %8 = arith.truncf %7 : vector<32x128xf32> to vector<32x128xbf16>
    %c0_13 = arith.constant 0 : index
    %c0_14 = arith.constant 0 : index
    %c0_15 = arith.constant 0 : index
    %9 = vector.load %arg1[%c0_13, %c0_14, %c0_15] : memref<3x128x128xbf16, #tpu.memory_space<vmem>>, vector<1x128x128xbf16>
    %10 = vector.shape_cast %9 : vector<1x128x128xbf16> to vector<128x128xbf16>
    %cst_16 = arith.constant dense<0.000000e+00> : vector<32x128xf32>
    %11 = tpu.matmul %8, %10, %cst_16 {dimension_numbers = #tpu.dot_dimension_numbers<[1], [0], [0], [1], [0, 0, 1, 1], [], []>} : vector<32x128xbf16>, vector<128x128xbf16>, vector<32x128xf32> -> vector<32x128xf32>
    %12 = arith.addf %5, %11 : vector<32x128xf32>
    %c0_17 = arith.constant 0 : index
    %c1_18 = arith.constant 1 : index
    %c0_19 = arith.constant 0 : index
    %13 = vector.load %arg9[%c0_17, %c1_18, %c0_19] : memref<2x18x128xf32, #tpu.memory_space<vmem>>, vector<2x16x128xf32>
    %14 = vector.shape_cast %13 : vector<2x16x128xf32> to vector<32x128xf32>
    %15 = arith.truncf %14 : vector<32x128xf32> to vector<32x128xbf16>
    %c1_20 = arith.constant 1 : index
    %c0_21 = arith.constant 0 : index
    %c0_22 = arith.constant 0 : index
    %16 = vector.load %arg1[%c1_20, %c0_21, %c0_22] : memref<3x128x128xbf16, #tpu.memory_space<vmem>>, vector<1x128x128xbf16>
    %17 = vector.shape_cast %16 : vector<1x128x128xbf16> to vector<128x128xbf16>
    %cst_23 = arith.constant dense<0.000000e+00> : vector<32x128xf32>
    %18 = tpu.matmul %15, %17, %cst_23 {dimension_numbers = #tpu.dot_dimension_numbers<[1], [0], [0], [1], [0, 0, 1, 1], [], []>} : vector<32x128xbf16>, vector<128x128xbf16>, vector<32x128xf32> -> vector<32x128xf32>
    %19 = arith.addf %12, %18 : vector<32x128xf32>
    %c0_24 = arith.constant 0 : index
    %c2 = arith.constant 2 : index
    %c0_25 = arith.constant 0 : index
    %20 = vector.load %arg9[%c0_24, %c2, %c0_25] : memref<2x18x128xf32, #tpu.memory_space<vmem>>, vector<2x16x128xf32>
    %21 = vector.shape_cast %20 : vector<2x16x128xf32> to vector<32x128xf32>
    %22 = arith.truncf %21 : vector<32x128xf32> to vector<32x128xbf16>
    %c2_26 = arith.constant 2 : index
    %c0_27 = arith.constant 0 : index
    %c0_28 = arith.constant 0 : index
    %23 = vector.load %arg1[%c2_26, %c0_27, %c0_28] : memref<3x128x128xbf16, #tpu.memory_space<vmem>>, vector<1x128x128xbf16>
    %24 = vector.shape_cast %23 : vector<1x128x128xbf16> to vector<128x128xbf16>
    %cst_29 = arith.constant dense<0.000000e+00> : vector<32x128xf32>
    %25 = tpu.matmul %22, %24, %cst_29 {dimension_numbers = #tpu.dot_dimension_numbers<[1], [0], [0], [1], [0, 0, 1, 1], [], []>} : vector<32x128xbf16>, vector<128x128xbf16>, vector<32x128xf32> -> vector<32x128xf32>
    %26 = arith.addf %19, %25 : vector<32x128xf32>
    %cst_30 = arith.constant dense<0.000000e+00> : vector<128xf32>
    %27 = vector.multi_reduction <add>, %26, %cst_30 [0] : vector<32x128xf32> to vector<128xf32>
    %28 = vector.shape_cast %27 : vector<128xf32> to vector<1x128xf32>
    %29 = arith.mulf %26, %26 : vector<32x128xf32>
    %cst_31 = arith.constant dense<0.000000e+00> : vector<128xf32>
    %30 = vector.multi_reduction <add>, %29, %cst_31 [0] : vector<32x128xf32> to vector<128xf32>
    %31 = vector.shape_cast %30 : vector<128xf32> to vector<1x128xf32>
    %c0_32 = arith.constant 0 : index
    %c0_33 = arith.constant 0 : index
    %32 = vector.load %arg3[%c0_32, %c0_33] : memref<128x128xf32, #tpu.memory_space<vmem>>, vector<128x128xf32>
    %cst_34 = arith.constant dense<0.000000e+00> : vector<1x128xf32>
    %33 = tpu.matmul %28, %32, %cst_34 {dimension_numbers = #tpu.dot_dimension_numbers<[1], [0], [0], [1], [0, 0, 1, 1], [], []>} : vector<1x128xf32>, vector<128x128xf32>, vector<1x128xf32> -> vector<1x128xf32>
    %c0_35 = arith.constant 0 : index
    %c0_36 = arith.constant 0 : index
    %34 = vector.load %arg3[%c0_35, %c0_36] : memref<128x128xf32, #tpu.memory_space<vmem>>, vector<128x128xf32>
    %cst_37 = arith.constant dense<0.000000e+00> : vector<1x128xf32>
    %35 = tpu.matmul %31, %34, %cst_37 {dimension_numbers = #tpu.dot_dimension_numbers<[1], [0], [0], [1], [0, 0, 1, 1], [], []>} : vector<1x128xf32>, vector<128x128xf32>, vector<1x128xf32> -> vector<1x128xf32>
    %cst_38 = arith.constant 0.001953125 : f32
    %36 = vector.broadcast %cst_38 : f32 to vector<1x128xf32>
    %37 = arith.mulf %33, %36 : vector<1x128xf32>
    %cst_39 = arith.constant 0.001953125 : f32
    %38 = vector.broadcast %cst_39 : f32 to vector<1x128xf32>
    %39 = arith.mulf %35, %38 : vector<1x128xf32>
    %40 = arith.mulf %37, %37 : vector<1x128xf32>
    %41 = arith.subf %39, %40 : vector<1x128xf32>
    %c0_40 = arith.constant 0 : index
    %c0_41 = arith.constant 0 : index
    %42 = vector.load %arg4[%c0_40, %c0_41] : memref<1x128xf32, #tpu.memory_space<vmem>>, vector<1x128xf32>
    %cst_42 = arith.constant 9.99999974E-6 : f32
    %43 = vector.broadcast %cst_42 : f32 to vector<1x128xf32>
    %44 = arith.addf %41, %43 : vector<1x128xf32>
    %45 = math.rsqrt %44 : vector<1x128xf32>
    %46 = arith.mulf %42, %45 : vector<1x128xf32>
    %c0_43 = arith.constant 0 : index
    %c0_44 = arith.constant 0 : index
    %47 = vector.load %arg5[%c0_43, %c0_44] : memref<1x128xf32, #tpu.memory_space<vmem>>, vector<1x128xf32>
    %48 = arith.mulf %37, %46 : vector<1x128xf32>
    %49 = arith.subf %47, %48 : vector<1x128xf32>
    %50 = vector.broadcast %46 : vector<1x128xf32> to vector<32x128xf32>
    %51 = arith.mulf %26, %50 : vector<32x128xf32>
    %52 = vector.broadcast %49 : vector<1x128xf32> to vector<32x128xf32>
    %53 = arith.addf %51, %52 : vector<32x128xf32>
    %cst_45 = arith.constant 0.000000e+00 : f32
    %54 = vector.broadcast %cst_45 : f32 to vector<32x128xf32>
    %55 = arith.maximumf %53, %54 : vector<32x128xf32>
    %56 = vector.shape_cast %55 : vector<32x128xf32> to vector<2x16x128xf32>
    %cst_46 = arith.constant 0.000000e+00 : f32
    %57 = vector.broadcast %cst_46 : f32 to vector<2x1x128xf32>
    %c0_47 = arith.constant 0 : index
    %c0_48 = arith.constant 0 : index
    %c0_49 = arith.constant 0 : index
    %58 = vector.load %arg9[%c0_47, %c0_48, %c0_49] : memref<2x18x128xf32, #tpu.memory_space<vmem>>, vector<2x1x128xf32>
    tpu.vector_store %arg9[%c0_47, %c0_48, %c0_49], %57 {strides = array<i32>} : memref<2x18x128xf32, #tpu.memory_space<vmem>>, vector<2x1x128xf32>,
    %c0_50 = arith.constant 0 : index
    %c17_51 = arith.constant 17 : index
    %c0_52 = arith.constant 0 : index
    %59 = vector.load %arg9[%c0_50, %c17_51, %c0_52] : memref<2x18x128xf32, #tpu.memory_space<vmem>>, vector<2x1x128xf32>
    tpu.vector_store %arg9[%c0_50, %c17_51, %c0_52], %57 {strides = array<i32>} : memref<2x18x128xf32, #tpu.memory_space<vmem>>, vector<2x1x128xf32>,
    %c0_53 = arith.constant 0 : index
    %c1_54 = arith.constant 1 : index
    %c0_55 = arith.constant 0 : index
    %60 = vector.load %arg9[%c0_53, %c1_54, %c0_55] : memref<2x18x128xf32, #tpu.memory_space<vmem>>, vector<2x16x128xf32>
    tpu.vector_store %arg9[%c0_53, %c1_54, %c0_55], %56 {strides = array<i32>} : memref<2x18x128xf32, #tpu.memory_space<vmem>>, vector<2x16x128xf32>,
    %cst_56 = arith.constant 0.000000e+00 : f32
    %61 = vector.broadcast %cst_56 : f32 to vector<32x128xf32>
    %c0_57 = arith.constant 0 : index
    %c0_58 = arith.constant 0 : index
    %c0_59 = arith.constant 0 : index
    %62 = vector.load %arg9[%c0_57, %c0_58, %c0_59] : memref<2x18x128xf32, #tpu.memory_space<vmem>>, vector<2x16x128xf32>
    %63 = vector.shape_cast %62 : vector<2x16x128xf32> to vector<32x128xf32>
    %64 = arith.truncf %63 : vector<32x128xf32> to vector<32x128xbf16>
    %c0_60 = arith.constant 0 : index
    %c0_61 = arith.constant 0 : index
    %c0_62 = arith.constant 0 : index
    %65 = vector.load %arg2[%c0_60, %c0_61, %c0_62] : memref<3x128x128xbf16, #tpu.memory_space<vmem>>, vector<1x128x128xbf16>
    %66 = vector.shape_cast %65 : vector<1x128x128xbf16> to vector<128x128xbf16>
    %cst_63 = arith.constant dense<0.000000e+00> : vector<32x128xf32>
    %67 = tpu.matmul %64, %66, %cst_63 {dimension_numbers = #tpu.dot_dimension_numbers<[1], [0], [0], [1], [0, 0, 1, 1], [], []>} : vector<32x128xbf16>, vector<128x128xbf16>, vector<32x128xf32> -> vector<32x128xf32>
    %68 = arith.addf %61, %67 : vector<32x128xf32>
    %c0_64 = arith.constant 0 : index
    %c1_65 = arith.constant 1 : index
    %c0_66 = arith.constant 0 : index
    %69 = vector.load %arg9[%c0_64, %c1_65, %c0_66] : memref<2x18x128xf32, #tpu.memory_space<vmem>>, vector<2x16x128xf32>
    %70 = vector.shape_cast %69 : vector<2x16x128xf32> to vector<32x128xf32>
    %71 = arith.truncf %70 : vector<32x128xf32> to vector<32x128xbf16>
    %c1_67 = arith.constant 1 : index
    %c0_68 = arith.constant 0 : index
    %c0_69 = arith.constant 0 : index
    %72 = vector.load %arg2[%c1_67, %c0_68, %c0_69] : memref<3x128x128xbf16, #tpu.memory_space<vmem>>, vector<1x128x128xbf16>
    %73 = vector.shape_cast %72 : vector<1x128x128xbf16> to vector<128x128xbf16>
    %cst_70 = arith.constant dense<0.000000e+00> : vector<32x128xf32>
    %74 = tpu.matmul %71, %73, %cst_70 {dimension_numbers = #tpu.dot_dimension_numbers<[1], [0], [0], [1], [0, 0, 1, 1], [], []>} : vector<32x128xbf16>, vector<128x128xbf16>, vector<32x128xf32> -> vector<32x128xf32>
    %75 = arith.addf %68, %74 : vector<32x128xf32>
    %c0_71 = arith.constant 0 : index
    %c2_72 = arith.constant 2 : index
    %c0_73 = arith.constant 0 : index
    %76 = vector.load %arg9[%c0_71, %c2_72, %c0_73] : memref<2x18x128xf32, #tpu.memory_space<vmem>>, vector<2x16x128xf32>
    %77 = vector.shape_cast %76 : vector<2x16x128xf32> to vector<32x128xf32>
    %78 = arith.truncf %77 : vector<32x128xf32> to vector<32x128xbf16>
    %c2_74 = arith.constant 2 : index
    %c0_75 = arith.constant 0 : index
    %c0_76 = arith.constant 0 : index
    %79 = vector.load %arg2[%c2_74, %c0_75, %c0_76] : memref<3x128x128xbf16, #tpu.memory_space<vmem>>, vector<1x128x128xbf16>
    %80 = vector.shape_cast %79 : vector<1x128x128xbf16> to vector<128x128xbf16>
    %cst_77 = arith.constant dense<0.000000e+00> : vector<32x128xf32>
    %81 = tpu.matmul %78, %80, %cst_77 {dimension_numbers = #tpu.dot_dimension_numbers<[1], [0], [0], [1], [0, 0, 1, 1], [], []>} : vector<32x128xbf16>, vector<128x128xbf16>, vector<32x128xf32> -> vector<32x128xf32>
    %82 = arith.addf %75, %81 : vector<32x128xf32>
    %cst_78 = arith.constant dense<0.000000e+00> : vector<128xf32>
    %83 = vector.multi_reduction <add>, %82, %cst_78 [0] : vector<32x128xf32> to vector<128xf32>
    %84 = vector.shape_cast %83 : vector<128xf32> to vector<1x128xf32>
    %85 = arith.mulf %82, %82 : vector<32x128xf32>
    %cst_79 = arith.constant dense<0.000000e+00> : vector<128xf32>
    %86 = vector.multi_reduction <add>, %85, %cst_79 [0] : vector<32x128xf32> to vector<128xf32>
    %87 = vector.shape_cast %86 : vector<128xf32> to vector<1x128xf32>
    %c0_80 = arith.constant 0 : index
    %c0_81 = arith.constant 0 : index
    %88 = vector.load %arg3[%c0_80, %c0_81] : memref<128x128xf32, #tpu.memory_space<vmem>>, vector<128x128xf32>
    %cst_82 = arith.constant dense<0.000000e+00> : vector<1x128xf32>
    %89 = tpu.matmul %84, %88, %cst_82 {dimension_numbers = #tpu.dot_dimension_numbers<[1], [0], [0], [1], [0, 0, 1, 1], [], []>} : vector<1x128xf32>, vector<128x128xf32>, vector<1x128xf32> -> vector<1x128xf32>
    %c0_83 = arith.constant 0 : index
    %c0_84 = arith.constant 0 : index
    %90 = vector.load %arg3[%c0_83, %c0_84] : memref<128x128xf32, #tpu.memory_space<vmem>>, vector<128x128xf32>
    %cst_85 = arith.constant dense<0.000000e+00> : vector<1x128xf32>
    %91 = tpu.matmul %87, %90, %cst_85 {dimension_numbers = #tpu.dot_dimension_numbers<[1], [0], [0], [1], [0, 0, 1, 1], [], []>} : vector<1x128xf32>, vector<128x128xf32>, vector<1x128xf32> -> vector<1x128xf32>
    %cst_86 = arith.constant 0.001953125 : f32
    %92 = vector.broadcast %cst_86 : f32 to vector<1x128xf32>
    %93 = arith.mulf %89, %92 : vector<1x128xf32>
    %cst_87 = arith.constant 0.001953125 : f32
    %94 = vector.broadcast %cst_87 : f32 to vector<1x128xf32>
    %95 = arith.mulf %91, %94 : vector<1x128xf32>
    %96 = arith.mulf %93, %93 : vector<1x128xf32>
    %97 = arith.subf %95, %96 : vector<1x128xf32>
    %c0_88 = arith.constant 0 : index
    %c0_89 = arith.constant 0 : index
    %98 = vector.load %arg6[%c0_88, %c0_89] : memref<1x128xf32, #tpu.memory_space<vmem>>, vector<1x128xf32>
    %cst_90 = arith.constant 9.99999974E-6 : f32
    %99 = vector.broadcast %cst_90 : f32 to vector<1x128xf32>
    %100 = arith.addf %97, %99 : vector<1x128xf32>
    %101 = math.rsqrt %100 : vector<1x128xf32>
    %102 = arith.mulf %98, %101 : vector<1x128xf32>
    %c0_91 = arith.constant 0 : index
    %c0_92 = arith.constant 0 : index
    %103 = vector.load %arg7[%c0_91, %c0_92] : memref<1x128xf32, #tpu.memory_space<vmem>>, vector<1x128xf32>
    %104 = arith.mulf %93, %102 : vector<1x128xf32>
    %105 = arith.subf %103, %104 : vector<1x128xf32>
    %106 = vector.broadcast %102 : vector<1x128xf32> to vector<32x128xf32>
    %107 = arith.mulf %82, %106 : vector<32x128xf32>
    %108 = vector.broadcast %105 : vector<1x128xf32> to vector<32x128xf32>
    %109 = arith.addf %107, %108 : vector<32x128xf32>
    %110 = vector.shape_cast %109 : vector<32x128xf32> to vector<2x16x128xf32>
    %111 = arith.addf %110, %0 : vector<2x16x128xf32>
    %cst_93 = arith.constant 0.000000e+00 : f32
    %112 = vector.broadcast %cst_93 : f32 to vector<2x16x128xf32>
    %113 = arith.maximumf %111, %112 : vector<2x16x128xf32>
    %c0_94 = arith.constant 0 : index
    %c0_95 = arith.constant 0 : index
    %c0_96 = arith.constant 0 : index
    %114 = vector.load %arg8[%c0_94, %c0_95, %c0_96] : memref<2x16x128xf32, #tpu.memory_space<vmem>>, vector<2x16x128xf32>
    tpu.vector_store %arg8[%c0_94, %c0_95, %c0_96], %113 {strides = array<i32>} : memref<2x16x128xf32, #tpu.memory_space<vmem>>, vector<2x16x128xf32>,
    return
  }
}

</mosaic_0001>

<llo_original>
// kernel: tile.23
$region0: #{tile.23}
  #allocation0 [shape = 's32[1]{0}', space=sflag, size = 0x4, scoped, tag = 'scoped memory for tile.23']
  %s0 = inlined_call_operand.vmem [shape: f32[8], index: 0, kind: input, shape index: {}]
  %s1 = inlined_call_operand.vmem [shape: f32[16,8], index: 1, kind: output, shape index: {}]
  // Predicated region
  $region2: #{tile.23} parent=0 // pred_check
    _
  $region3: #{tile.23} parent=0 // pred_check_branch
    %3 = sbr.rel (0) target = $region5
  $region4: #{tile.23} parent=0 // pred_region
    _
  $region5: #{tile.23} parent=0 // pred_fallthru
    _
  %v4 = vld [vmem:[%s0] ss:$0 sm:$0xff]
  %5 = vst [vmem:[%s1] sm:$0xff] %v4
  %s6 = scalar_lea.vmem %s1, 8
  %7 = vst [vmem:[%s6] sm:$0xff] %v4

// kernel: tile.24
$region0: #{tile.24}
  %s0 = inlined_call_operand.vmem [shape: f32[16,8], index: 0, kind: input, shape index: {}]
  %s1 = inlined_call_operand.vmem [shape: f32[1,128], index: 1, kind: output, shape index: {}]
  $region1: #{tile.24} parent=0
    #allocation0 [shape = 'u8[4096]{0}', space=vmem, size = 0x1000, scoped, tag = 'scoped mem for output reshape']
    %v2 = vld [vmem:[%s0] sm:$0x1]
    %vm3 = vcmask 64512
    %4 = vst.msk [vmem:[#allocation0] sm:$0x1] %vm3, %v2
    %s5 = scalar_lea.vmem %s0, 15
    %v6 = vld [vmem:[%s5] sm:$0x1]
    %7 = vrot.lane.b32.xlu0 %v6, 120
    %v8 = vpop.permute.xlu0 %7
    %vm9 = vcmask 1048512
    %10 = vst.msk [vmem:[#allocation0] sm:$0x1] %vm9, %v8
    %s11 = scalar_lea.vmem %s0, 14
    %v12 = vld [vmem:[%s11] sm:$0x1]
    %13 = vrot.lane.b32.xlu0 %v12, 112
    %v14 = vpop.permute.xlu0 %13
    %vm15 = vcmask 982912
    %16 = vst.msk [vmem:[#allocation0] sm:$0x1] %vm15, %v14
    %s17 = scalar_lea.vmem %s0, 13
    %v18 = vld [vmem:[%s17] sm:$0x1]
    %19 = vrot.lane.b32.xlu0 %v18, 104
    %v20 = vpop.permute.xlu0 %19
    %vm21 = vcmask 917312
    %22 = vst.msk [vmem:[#allocation0] sm:$0x1] %vm21, %v20
    %s23 = scalar_lea.vmem %s0, 12
    %v24 = vld [vmem:[%s23] sm:$0x1]
    %25 = vrot.lane.b32.xlu0 %v24, 96
    %v26 = vpop.permute.xlu0 %25
    %vm27 = vcmask 851712
    %28 = vst.msk [vmem:[#allocation0] sm:$0x1] %vm27, %v26
    %s29 = scalar_lea.vmem %s0, 11
    %v30 = vld [vmem:[%s29] sm:$0x1]
    %31 = vrot.lane.b32.xlu0 %v30, 88
    %v32 = vpop.permute.xlu0 %31
    %vm33 = vcmask 786112
    %34 = vst.msk [vmem:[#allocation0] sm:$0x1] %vm33, %v32
    %s35 = scalar_lea.vmem %s0, 10
    %v36 = vld [vmem:[%s35] sm:$0x1]
    %37 = vrot.lane.b32.xlu0 %v36, 80
    %v38 = vpop.permute.xlu0 %37
    %vm39 = vcmask 720512
    %40 = vst.msk [vmem:[#allocation0] sm:$0x1] %vm39, %v38
    %s41 = scalar_lea.vmem %s0, 9
    %v42 = vld [vmem:[%s41] sm:$0x1]
    %43 = vrot.lane.b32.xlu0 %v42, 72
    %v44 = vpop.permute.xlu0 %43
    %vm45 = vcmask 654912
    %46 = vst.msk [vmem:[#allocation0] sm:$0x1] %vm45, %v44
    %s47 = scalar_lea.vmem %s0, 8
    %v48 = vld [vmem:[%s47] sm:$0x1]
    %49 = vrot.lane.b32.xlu0 %v48, 64
    %v50 = vpop.permute.xlu0 %49
    %vm51 = vcmask 589312
    %52 = vst.msk [vmem:[#allocation0] sm:$0x1] %vm51, %v50
    %s53 = scalar_lea.vmem %s0, 7
    %v54 = vld [vmem:[%s53] sm:$0x1]
    %55 = vrot.lane.b32.xlu0 %v54, 56
    %v56 = vpop.permute.xlu0 %55
    %vm57 = vcmask 523712
    %58 = vst.msk [vmem:[#allocation0] sm:$0x1] %vm57, %v56
    %s59 = scalar_lea.vmem %s0, 6
    %v60 = vld [vmem:[%s59] sm:$0x1]
    %61 = vrot.lane.b32.xlu0 %v60, 48
    %v62 = vpop.permute.xlu0 %61
    %vm63 = vcmask 458112
    %64 = vst.msk [vmem:[#allocation0] sm:$0x1] %vm63, %v62
    %s65 = scalar_lea.vmem %s0, 5
    %v66 = vld [vmem:[%s65] sm:$0x1]
    %67 = vrot.lane.b32.xlu0 %v66, 40
    %v68 = vpop.permute.xlu0 %67
    %vm69 = vcmask 392512
    %70 = vst.msk [vmem:[#allocation0] sm:$0x1] %vm69, %v68
    %s71 = scalar_lea.vmem %s0, 4
    %v72 = vld [vmem:[%s71] sm:$0x1]
    %73 = vrot.lane.b32.xlu0 %v72, 32
    %v74 = vpop.permute.xlu0 %73
    %vm75 = vcmask 326912
    %76 = vst.msk [vmem:[#allocation0] sm:$0x1] %vm75, %v74
    %s77 = scalar_lea.vmem %s0, 3
    %v78 = vld [vmem:[%s77] sm:$0x1]
    %79 = vrot.lane.b32.xlu0 %v78, 24
    %v80 = vpop.permute.xlu0 %79
    %vm81 = vcmask 261312
    %82 = vst.msk [vmem:[#allocation0] sm:$0x1] %vm81, %v80
    %s83 = scalar_lea.vmem %s0, 2
    %v84 = vld [vmem:[%s83] sm:$0x1]
    %85 = vrot.lane.b32.xlu0 %v84, 16
    %v86 = vpop.permute.xlu0 %85
    %vm87 = vcmask 195712
    %88 = vst.msk [vmem:[#allocation0] sm:$0x1] %vm87, %v86
    %s89 = scalar_lea.vmem %s0, 1
    %v90 = vld [vmem:[%s89] sm:$0x1]
    %91 = vrot.lane.b32.xlu0 %v90, 8
    %v92 = vpop.permute.xlu0 %91
    %vm93 = vcmask 130112
    %94 = vst.msk [vmem:[#allocation0] sm:$0x1] %vm93, %v92
    %s96 = ssub.s32 2, 1
    %v97 = vld [vmem:[#allocation0] sm:%s96]
    %s99 = ssub.s32 2, 1
    %100 = vst [vmem:[%s1] sm:%s99] %v97

// kernel: basic_block.1
$region0: #{basic_block.1}
  #allocation0 [shape = 'u32[]', space=smem, size = 0x4, offset = 0x4, fixed_abs, tag = 'smem constant byte address 0x4 - core index']
  #allocation1 [shape = 'u32[72,128]{1,0:T(1,128)}', space=vmem, size = 0x9000, scoped, tag = 'internal scratch']
  #allocation2 [shape = 'f32[2,18,128]{2,1,0:T(8,128)}', space=vmem, size = 0x6000, scoped, tag = 'scratch operand']
  %s0 = inlined_call_operand.vmem [shape: f32[2,16,128], index: 0, kind: input, shape index: {}]
  %s1 = inlined_call_operand.vmem [shape: bf16[3,128,128], index: 1, kind: input, shape index: {}]
  %s2 = inlined_call_operand.vmem [shape: bf16[3,128,128], index: 2, kind: input, shape index: {}]
  %s3 = inlined_call_operand.vmem [shape: f32[128,128], index: 3, kind: input, shape index: {}]
  %s4 = inlined_call_operand.vmem [shape: f32[1,128], index: 4, kind: input, shape index: {}]
  %s5 = inlined_call_operand.vmem [shape: f32[1,128], index: 5, kind: input, shape index: {}]
  %s6 = inlined_call_operand.vmem [shape: f32[1,128], index: 6, kind: input, shape index: {}]
  %s7 = inlined_call_operand.vmem [shape: f32[1,128], index: 7, kind: input, shape index: {}]
  %s8 = inlined_call_operand.vmem [shape: f32[2,16,128], index: 8, kind: output, shape index: {}]
  %s9 = sld [smem:[#allocation0]]
  $region42: #{basic_block.1} parent=0
    _
  %s11 = ssub.s32 1, %s9
  %s12 = scalar_select 0, %s11, %s9
  // Predicated region
  $region2: #{basic_block.1} parent=0 // pred_check
    _
  $region3: #{basic_block.1} parent=0 // pred_check_branch
    %14 = sbr.rel (0) target = $region5
  $region4: #{basic_block.1} parent=0 // pred_region
    _
  $region5: #{basic_block.1} parent=0 // pred_fallthru
    _
  // Predicated region
  $region6: #{basic_block.1} parent=0 // pred_check
    _
  $region7: #{basic_block.1} parent=0 // pred_check_branch
    %16 = sbr.rel (0) target = $region9
  $region8: #{basic_block.1} parent=0 // pred_region
    _
  $region9: #{basic_block.1} parent=0 // pred_fallthru
    _
  // Predicated region
  $region10: #{basic_block.1} parent=0 // pred_check
    _
  $region11: #{basic_block.1} parent=0 // pred_check_branch
    %18 = sbr.rel (0) target = $region13
  $region12: #{basic_block.1} parent=0 // pred_region
    _
  $region13: #{basic_block.1} parent=0 // pred_fallthru
    _
  // Predicated region
  $region14: #{basic_block.1} parent=0 // pred_check
    _
  $region15: #{basic_block.1} parent=0 // pred_check_branch
    %20 = sbr.rel (0) target = $region17
  $region16: #{basic_block.1} parent=0 // pred_region
    _
  $region17: #{basic_block.1} parent=0 // pred_fallthru
    _
  // Predicated region
  $region18: #{basic_block.1} parent=0 // pred_check
    _
  $region19: #{basic_block.1} parent=0 // pred_check_branch
    %22 = sbr.rel (0) target = $region21
  $region20: #{basic_block.1} parent=0 // pred_region
    _
  $region21: #{basic_block.1} parent=0 // pred_fallthru
    _
  // Predicated region
  $region22: #{basic_block.1} parent=0 // pred_check
    _
  $region23: #{basic_block.1} parent=0 // pred_check_branch
    %24 = sbr.rel (0) target = $region25
  $region24: #{basic_block.1} parent=0 // pred_region
    _
  $region25: #{basic_block.1} parent=0 // pred_fallthru
    _
  // Predicated region
  $region26: #{basic_block.1} parent=0 // pred_check
    _
  $region27: #{basic_block.1} parent=0 // pred_check_branch
    %26 = sbr.rel (0) target = $region29
  $region28: #{basic_block.1} parent=0 // pred_region
    _
  $region29: #{basic_block.1} parent=0 // pred_fallthru
    _
  // Predicated region
  $region30: #{basic_block.1} parent=0 // pred_check
    _
  $region31: #{basic_block.1} parent=0 // pred_check_branch
    %28 = sbr.rel (0) target = $region33
  $region32: #{basic_block.1} parent=0 // pred_region
    _
  $region33: #{basic_block.1} parent=0 // pred_fallthru
    _
  %v29 = vld [vmem:[%s0] sm:$0xff]
  %v30 = vld [vmem:[%s0 + $0x8] sm:$0xff]
  %v31 = vld [vmem:[%s0 + $0x10] sm:$0xff]
  %v32 = vld [vmem:[%s0 + $0x18] sm:$0xff]
  %33 = vst [vmem:[#allocation2] sm:$0x1] 0.0
  %34 = vst [vmem:[#allocation2 + $0x18] sm:$0x1] 0.0
  %35 = vst [vmem:[#allocation2 + $0x11] sm:$0x1] 0.0
  %36 = vst [vmem:[#allocation2 + $0x29] sm:$0x1] 0.0
  %37 = vst [vmem:[#allocation2 + $0x1] sm:$0xff] %v29
  %38 = vst [vmem:[#allocation2 + $0x9] sm:$0xff] %v30
  %39 = vst [vmem:[#allocation2 + $0x19] sm:$0xff] %v31
  %40 = vst [vmem:[#allocation2 + $0x21] sm:$0xff] %v32
  %v41 = vld [vmem:[#allocation2] sm:$0xff]
  %v42 = vld [vmem:[#allocation2 + $0x8] sm:$0xff]
  %v43 = vld [vmem:[#allocation2 + $0x18] sm:$0xff]
  %v44 = vld [vmem:[#allocation2 + $0x20] sm:$0xff]
  %v45 = vpack.c.bf16 %v42, %v41
  %v46 = vpack.c.bf16 %v44, %v43
  %v47 = vld [vmem:[%s1] sm:$0xf]
  %v48 = vld [vmem:[%s1 + $0x4] sm:$0xf]
  %v49 = vld [vmem:[%s1 + $0x8] sm:$0xf]
  %v50 = vld [vmem:[%s1 + $0xc] sm:$0xf]
  %v51 = vld [vmem:[%s1 + $0x10] sm:$0xf]
  %v52 = vld [vmem:[%s1 + $0x14] sm:$0xf]
  %v53 = vld [vmem:[%s1 + $0x18] sm:$0xf]
  %v54 = vld [vmem:[%s1 + $0x1c] sm:$0xf]
  %v55 = vld [vmem:[%s1 + $0x20] sm:$0xf]
  %v56 = vld [vmem:[%s1 + $0x24] sm:$0xf]
  %v57 = vld [vmem:[%s1 + $0x28] sm:$0xf]
  %v58 = vld [vmem:[%s1 + $0x2c] sm:$0xf]
  %v59 = vld [vmem:[%s1 + $0x30] sm:$0xf]
  %v60 = vld [vmem:[%s1 + $0x34] sm:$0xf]
  %v61 = vld [vmem:[%s1 + $0x38] sm:$0xf]
  %v62 = vld [vmem:[%s1 + $0x3c] sm:$0xf]
  %v63 = vld [vmem:[#allocation2 + $0x1] sm:$0xff]
  %v64 = vld [vmem:[#allocation2 + $0x9] sm:$0xff]
  %v65 = vld [vmem:[#allocation2 + $0x19] sm:$0xff]
  %v66 = vld [vmem:[#allocation2 + $0x21] sm:$0xff]
  %v67 = vpack.c.bf16 %v64, %v63
  %v68 = vpack.c.bf16 %v66, %v65
  %s69 = scalar_lea.vmem %s1, 64
  %v70 = vld [vmem:[%s69] sm:$0xf]
  %v71 = vld [vmem:[%s69 + $0x4] sm:$0xf]
  %v72 = vld [vmem:[%s69 + $0x8] sm:$0xf]
  %v73 = vld [vmem:[%s69 + $0xc] sm:$0xf]
  %v74 = vld [vmem:[%s69 + $0x10] sm:$0xf]
  %v75 = vld [vmem:[%s69 + $0x14] sm:$0xf]
  %v76 = vld [vmem:[%s69 + $0x18] sm:$0xf]
  %v77 = vld [vmem:[%s69 + $0x1c] sm:$0xf]
  %v78 = vld [vmem:[%s69 + $0x20] sm:$0xf]
  %v79 = vld [vmem:[%s69 + $0x24] sm:$0xf]
  %v80 = vld [vmem:[%s69 + $0x28] sm:$0xf]
  %v81 = vld [vmem:[%s69 + $0x2c] sm:$0xf]
  %v82 = vld [vmem:[%s69 + $0x30] sm:$0xf]
  %v83 = vld [vmem:[%s69 + $0x34] sm:$0xf]
  %v84 = vld [vmem:[%s69 + $0x38] sm:$0xf]
  %v85 = vld [vmem:[%s69 + $0x3c] sm:$0xf]
  %v102 = vunpack.c.l.b16 %v70
  %v103 = vunpack.c.l.b16 %v71
  %v104 = vunpack.c.l.b16 %v72
  %v105 = vunpack.c.l.b16 %v73
  %v106 = vunpack.c.l.b16 %v74
  %v107 = vunpack.c.l.b16 %v75
  %v108 = vunpack.c.l.b16 %v76
  %v109 = vunpack.c.l.b16 %v77
  %v110 = vunpack.c.l.b16 %v78
  %v111 = vunpack.c.l.b16 %v79
  %v112 = vunpack.c.l.b16 %v80
  %v113 = vunpack.c.l.b16 %v81
  %v114 = vunpack.c.l.b16 %v82
  %v115 = vunpack.c.l.b16 %v83
  %v116 = vunpack.c.l.b16 %v84
  %v117 = vunpack.c.l.b16 %v85
  %v118 = vpack.c.b16 %v103, %v102
  %v119 = vpack.c.b16 %v105, %v104
  %v120 = vpack.c.b16 %v107, %v106
  %v121 = vpack.c.b16 %v109, %v108
  %v122 = vpack.c.b16 %v111, %v110
  %v123 = vpack.c.b16 %v113, %v112
  %v124 = vpack.c.b16 %v115, %v114
  %v125 = vpack.c.b16 %v117, %v116
  %134 = vmatpush.bf16.msra.mxu0 %v125
  %135 = vmatpush.bf16.msra.mxu0 %v124
  %136 = vmatpush.bf16.msra.mxu0 %v123
  %137 = vmatpush.bf16.msra.mxu0 %v122
  %138 = vmatpush.bf16.msra.mxu0 %v121
  %139 = vmatpush.bf16.msra.mxu0 %v120
  %140 = vmatpush.bf16.msra.mxu0 %v119
  %141 = vmatpush.bf16.msra.mxu0 %v118
  %142 = vmatmul.bf16.gmra.mxu0 %v67
  %v143 = vpop.f32.mrf.mxu0
  %v144 = vadd.f32 0.0, %v143
  %v145 = vpop.f32.mrf.mxu0
  %v146 = vadd.f32 0.0, %v145
  %147 = vmatmul.bf16.gmra.mxu0 %v68
  %v148 = vpop.f32.mrf.mxu0
  %v149 = vadd.f32 0.0, %v148
  %v150 = vpop.f32.mrf.mxu0
  %v151 = vadd.f32 0.0, %v150
  %152 = vdwg.mxu0
  %v169 = vunpack.c.l.b16 %v47
  %v170 = vunpack.c.l.b16 %v48
  %v171 = vunpack.c.l.b16 %v49
  %v172 = vunpack.c.l.b16 %v50
  %v173 = vunpack.c.l.b16 %v51
  %v174 = vunpack.c.l.b16 %v52
  %v175 = vunpack.c.l.b16 %v53
  %v176 = vunpack.c.l.b16 %v54
  %v177 = vunpack.c.l.b16 %v55
  %v178 = vunpack.c.l.b16 %v56
  %v179 = vunpack.c.l.b16 %v57
  %v180 = vunpack.c.l.b16 %v58
  %v181 = vunpack.c.l.b16 %v59
  %v182 = vunpack.c.l.b16 %v60
  %v183 = vunpack.c.l.b16 %v61
  %v184 = vunpack.c.l.b16 %v62
  %v185 = vpack.c.b16 %v170, %v169
  %v186 = vpack.c.b16 %v172, %v171
  %v187 = vpack.c.b16 %v174, %v173
  %v188 = vpack.c.b16 %v176, %v175
  %v189 = vpack.c.b16 %v178, %v177
  %v190 = vpack.c.b16 %v180, %v179
  %v191 = vpack.c.b16 %v182, %v181
  %v192 = vpack.c.b16 %v184, %v183
  %201 = vmatpush.bf16.msra.mxu0 %v192
  %202 = vmatpush.bf16.msra.mxu0 %v191
  %203 = vmatpush.bf16.msra.mxu0 %v190
  %204 = vmatpush.bf16.msra.mxu0 %v189
  %205 = vmatpush.bf16.msra.mxu0 %v188
  %206 = vmatpush.bf16.msra.mxu0 %v187
  %207 = vmatpush.bf16.msra.mxu0 %v186
  %208 = vmatpush.bf16.msra.mxu0 %v185
  %209 = vmatmul.bf16.gmra.mxu0 %v45
  %v210 = vpop.f32.mrf.mxu0
  %v211 = vadd.f32 %v144, %v210
  %v212 = vpop.f32.mrf.mxu0
  %v213 = vadd.f32 %v146, %v212
  %214 = vmatmul.bf16.gmra.mxu0 %v46
  %v215 = vpop.f32.mrf.mxu0
  %v216 = vadd.f32 %v149, %v215
  %v217 = vpop.f32.mrf.mxu0
  %v218 = vadd.f32 %v151, %v217
  %219 = vdwg.mxu0
  %v220 = vld [vmem:[#allocation2 + $0x2] sm:$0xff]
  %v221 = vld [vmem:[#allocation2 + $0xa] sm:$0xff]
  %v222 = vld [vmem:[#allocation2 + $0x1a] sm:$0xff]
  %v223 = vld [vmem:[#allocation2 + $0x22] sm:$0xff]
  %v224 = vpack.c.bf16 %v221, %v220
  %v225 = vpack.c.bf16 %v223, %v222
  %s226 = scalar_lea.vmem %s1, 128
  %v227 = vld [vmem:[%s226] sm:$0xf]
  %v228 = vld [vmem:[%s226 + $0x4] sm:$0xf]
  %v229 = vld [vmem:[%s226 + $0x8] sm:$0xf]
  %v230 = vld [vmem:[%s226 + $0xc] sm:$0xf]
  %v231 = vld [vmem:[%s226 + $0x10] sm:$0xf]
  %v232 = vld [vmem:[%s226 + $0x14] sm:$0xf]
  %v233 = vld [vmem:[%s226 + $0x18] sm:$0xf]
  %v234 = vld [vmem:[%s226 + $0x1c] sm:$0xf]
  %v235 = vld [vmem:[%s226 + $0x20] sm:$0xf]
  %v236 = vld [vmem:[%s226 + $0x24] sm:$0xf]
  %v237 = vld [vmem:[%s226 + $0x28] sm:$0xf]
  %v238 = vld [vmem:[%s226 + $0x2c] sm:$0xf]
  %v239 = vld [vmem:[%s226 + $0x30] sm:$0xf]
  %v240 = vld [vmem:[%s226 + $0x34] sm:$0xf]
  %v241 = vld [vmem:[%s226 + $0x38] sm:$0xf]
  %v242 = vld [vmem:[%s226 + $0x3c] sm:$0xf]
  %v259 = vunpack.c.l.b16 %v227
  %v260 = vunpack.c.l.b16 %v228
  %v261 = vunpack.c.l.b16 %v229
  %v262 = vunpack.c.l.b16 %v230
  %v263 = vunpack.c.l.b16 %v231
  %v264 = vunpack.c.l.b16 %v232
  %v265 = vunpack.c.l.b16 %v233
  %v266 = vunpack.c.l.b16 %v234
  %v267 = vunpack.c.l.b16 %v235
  %v268 = vunpack.c.l.b16 %v236
  %v269 = vunpack.c.l.b16 %v237
  %v270 = vunpack.c.l.b16 %v238
  %v271 = vunpack.c.l.b16 %v239
  %v272 = vunpack.c.l.b16 %v240
  %v273 = vunpack.c.l.b16 %v241
  %v274 = vunpack.c.l.b16 %v242
  %v275 = vpack.c.b16 %v260, %v259
  %v276 = vpack.c.b16 %v262, %v261
  %v277 = vpack.c.b16 %v264, %v263
  %v278 = vpack.c.b16 %v266, %v265
  %v279 = vpack.c.b16 %v268, %v267
  %v280 = vpack.c.b16 %v270, %v269
  %v281 = vpack.c.b16 %v272, %v271
  %v282 = vpack.c.b16 %v274, %v273
  %291 = vmatpush.bf16.msra.mxu0 %v282
  %292 = vmatpush.bf16.msra.mxu0 %v281
  %293 = vmatpush.bf16.msra.mxu0 %v280
  %294 = vmatpush.bf16.msra.mxu0 %v279
  %295 = vmatpush.bf16.msra.mxu0 %v278
  %296 = vmatpush.bf16.msra.mxu0 %v277
  %297 = vmatpush.bf16.msra.mxu0 %v276
  %298 = vmatpush.bf16.msra.mxu0 %v275
  %299 = vmatmul.bf16.gmra.mxu0 %v224
  %v300 = vpop.f32.mrf.mxu0
  %v301 = vadd.f32 0.0, %v300
  %v302 = vpop.f32.mrf.mxu0
  %v303 = vadd.f32 0.0, %v302
  %304 = vmatmul.bf16.gmra.mxu0 %v225
  %v305 = vpop.f32.mrf.mxu0
  %v306 = vadd.f32 0.0, %v305
  %v307 = vpop.f32.mrf.mxu0
  %v308 = vadd.f32 0.0, %v307
  %309 = vdwg.mxu0
  %v310 = vadd.f32 %v211, %v301
  %v311 = vadd.f32 %v213, %v303
  %v312 = vadd.f32 %v216, %v306
  %v313 = vadd.f32 %v218, %v308
  %v314 = vadd.f32 %v310, %v311
  %v315 = vadd.f32 %v314, %v312
  %v316 = vadd.f32 %v315, %v313
  %v317 = vrot.slane %v316, 4
  %v318 = vadd.f32 %v316, %v317
  %v319 = vrot.slane %v318, 2
  %v320 = vadd.f32 %v318, %v319
  %v321 = vrot.slane %v320, 1
  %v322 = vadd.f32 %v320, %v321
  %v323 = vmul.f32 %v310, %v310
  %v324 = vmul.f32 %v311, %v311
  %v325 = vmul.f32 %v312, %v312
  %v326 = vmul.f32 %v313, %v313
  %v327 = vadd.f32 %v323, %v324
  %v328 = vadd.f32 %v327, %v325
  %v329 = vadd.f32 %v328, %v326
  %v330 = vrot.slane %v329, 4
  %v331 = vadd.f32 %v329, %v330
  %v332 = vrot.slane %v331, 2
  %v333 = vadd.f32 %v331, %v332
  %v334 = vrot.slane %v333, 1
  %v335 = vadd.f32 %v333, %v334
  %v336 = vld [vmem:[%s3] sm:$0xff]
  %v337 = vld [vmem:[%s3 + $0x8] sm:$0xff]
  %v338 = vld [vmem:[%s3 + $0x10] sm:$0xff]
  %v339 = vld [vmem:[%s3 + $0x18] sm:$0xff]
  %v340 = vld [vmem:[%s3 + $0x20] sm:$0xff]
  %v341 = vld [vmem:[%s3 + $0x28] sm:$0xff]
  %v342 = vld [vmem:[%s3 + $0x30] sm:$0xff]
  %v343 = vld [vmem:[%s3 + $0x38] sm:$0xff]
  %v344 = vld [vmem:[%s3 + $0x40] sm:$0xff]
  %v345 = vld [vmem:[%s3 + $0x48] sm:$0xff]
  %v346 = vld [vmem:[%s3 + $0x50] sm:$0xff]
  %v347 = vld [vmem:[%s3 + $0x58] sm:$0xff]
  %v348 = vld [vmem:[%s3 + $0x60] sm:$0xff]
  %v349 = vld [vmem:[%s3 + $0x68] sm:$0xff]
  %v350 = vld [vmem:[%s3 + $0x70] sm:$0xff]
  %v351 = vld [vmem:[%s3 + $0x78] sm:$0xff]
  %352 = vmatpush.msra.mxu0 %v351
  %353 = vmatpush.msra.mxu0 %v350
  %354 = vmatpush.msra.mxu0 %v349
  %355 = vmatpush.msra.mxu0 %v348
  %356 = vmatpush.msra.mxu0 %v347
  %357 = vmatpush.msra.mxu0 %v346
  %358 = vmatpush.msra.mxu0 %v345
  %359 = vmatpush.msra.mxu0 %v344
  %360 = vmatpush.msra.mxu0 %v343
  %361 = vmatpush.msra.mxu0 %v342
  %362 = vmatpush.msra.mxu0 %v341
  %363 = vmatpush.msra.mxu0 %v340
  %364 = vmatpush.msra.mxu0 %v339
  %365 = vmatpush.msra.mxu0 %v338
  %366 = vmatpush.msra.mxu0 %v337
  %367 = vmatpush.msra.mxu0 %v336
  %368 = vmatmul.f32.gmra.mxu0 %v322
  %v369 = vpop.f32.mrf.mxu0
  %v370 = vadd.f32 0.0, %v369
  %371 = vdwg.mxu0
  %372 = vmatpush.msra.mxu0 %v351
  %373 = vmatpush.msra.mxu0 %v350
  %374 = vmatpush.msra.mxu0 %v349
  %375 = vmatpush.msra.mxu0 %v348
  %376 = vmatpush.msra.mxu0 %v347
  %377 = vmatpush.msra.mxu0 %v346
  %378 = vmatpush.msra.mxu0 %v345
  %379 = vmatpush.msra.mxu0 %v344
  %380 = vmatpush.msra.mxu0 %v343
  %381 = vmatpush.msra.mxu0 %v342
  %382 = vmatpush.msra.mxu0 %v341
  %383 = vmatpush.msra.mxu0 %v340
  %384 = vmatpush.msra.mxu0 %v339
  %385 = vmatpush.msra.mxu0 %v338
  %386 = vmatpush.msra.mxu0 %v337
  %387 = vmatpush.msra.mxu0 %v336
  %388 = vmatmul.f32.gmra.mxu0 %v335
  %v389 = vpop.f32.mrf.mxu0
  %v390 = vadd.f32 0.0, %v389
  %391 = vdwg.mxu0
  %v392 = vmul.f32 %v370, 0.001953125
  %v393 = vmul.f32 %v390, 0.001953125
  %v394 = vmul.f32 %v392, %v392
  %v395 = vsub.f32 %v393, %v394
  %v396 = vld [vmem:[%s4] sm:$0x1]
  %v397 = vadd.f32 %v395, 1e-05
  %v398 = vrsqrt.pop %v397
  %v399 = vmul.f32 %v398, %v397
  %v400 = vmul.f32 %v399, %v398
  %v401 = vmul.f32 0.5, %v400
  %v402 = vsub.f32 1.5, %v401
  %v403 = vmul.f32 %v398, %v402
  %vm404 = vweird.f32 %v397
  %vm405 = vweird.f32 %v398
  %vm406 = vmor %vm404, %vm405
  %v407 = vsel %vm406, %v398, %v403
  %v408 = vmul.f32 %v396, %v407
  %v409 = vld [vmem:[%s5] sm:$0x1]
  %v410 = vmul.f32 %v392, %v408
  %v411 = vsub.f32 %v409, %v410
  %v413 = vperm.slane %v408, 0
  %v415 = vmul.f32 %v310, %v413
  %v416 = vmul.f32 %v311, %v413
  %v417 = vmul.f32 %v312, %v413
  %v418 = vmul.f32 %v313, %v413
  %v420 = vperm.slane %v411, 0
  %v422 = vadd.f32 %v415, %v420
  %v423 = vadd.f32 %v416, %v420
  %v424 = vadd.f32 %v417, %v420
  %v425 = vadd.f32 %v418, %v420
  %v426 = vmax.f32 %v422, 0.0
  %v427 = vmax.f32 %v423, 0.0
  %v428 = vmax.f32 %v424, 0.0
  %v429 = vmax.f32 %v425, 0.0
  %430 = vst [vmem:[#allocation2] sm:$0x1] 0.0
  %431 = vst [vmem:[#allocation2 + $0x18] sm:$0x1] 0.0
  %432 = vst [vmem:[#allocation2 + $0x11] sm:$0x1] 0.0
  %433 = vst [vmem:[#allocation2 + $0x29] sm:$0x1] 0.0
  %434 = vst [vmem:[#allocation2 + $0x1] sm:$0xff] %v426
  %435 = vst [vmem:[#allocation2 + $0x9] sm:$0xff] %v427
  %436 = vst [vmem:[#allocation2 + $0x19] sm:$0xff] %v428
  %437 = vst [vmem:[#allocation2 + $0x21] sm:$0xff] %v429
  %v438 = vld [vmem:[#allocation2] sm:$0xff]
  %v439 = vld [vmem:[#allocation2 + $0x8] sm:$0xff]
  %v440 = vld [vmem:[#allocation2 + $0x18] sm:$0xff]
  %v441 = vld [vmem:[#allocation2 + $0x20] sm:$0xff]
  %v442 = vpack.c.bf16 %v439, %v438
  %v443 = vpack.c.bf16 %v441, %v440
  %v444 = vld [vmem:[%s2] sm:$0xf]
  %v445 = vld [vmem:[%s2 + $0x4] sm:$0xf]
  %v446 = vld [vmem:[%s2 + $0x8] sm:$0xf]
  %v447 = vld [vmem:[%s2 + $0xc] sm:$0xf]
  %v448 = vld [vmem:[%s2 + $0x10] sm:$0xf]
  %v449 = vld [vmem:[%s2 + $0x14] sm:$0xf]
  %v450 = vld [vmem:[%s2 + $0x18] sm:$0xf]
  %v451 = vld [vmem:[%s2 + $0x1c] sm:$0xf]
  %v452 = vld [vmem:[%s2 + $0x20] sm:$0xf]
  %v453 = vld [vmem:[%s2 + $0x24] sm:$0xf]
  %v454 = vld [vmem:[%s2 + $0x28] sm:$0xf]
  %v455 = vld [vmem:[%s2 + $0x2c] sm:$0xf]
  %v456 = vld [vmem:[%s2 + $0x30] sm:$0xf]
  %v457 = vld [vmem:[%s2 + $0x34] sm:$0xf]
  %v458 = vld [vmem:[%s2 + $0x38] sm:$0xf]
  %v459 = vld [vmem:[%s2 + $0x3c] sm:$0xf]
  %v460 = vld [vmem:[#allocation2 + $0x1] sm:$0xff]
  %v461 = vld [vmem:[#allocation2 + $0x9] sm:$0xff]
  %v462 = vld [vmem:[#allocation2 + $0x19] sm:$0xff]
  %v463 = vld [vmem:[#allocation2 + $0x21] sm:$0xff]
  %v464 = vpack.c.bf16 %v461, %v460
  %v465 = vpack.c.bf16 %v463, %v462
  %s466 = scalar_lea.vmem %s2, 64
  %v467 = vld [vmem:[%s466] sm:$0xf]
  %v468 = vld [vmem:[%s466 + $0x4] sm:$0xf]
  %v469 = vld [vmem:[%s466 + $0x8] sm:$0xf]
  %v470 = vld [vmem:[%s466 + $0xc] sm:$0xf]
  %v471 = vld [vmem:[%s466 + $0x10] sm:$0xf]
  %v472 = vld [vmem:[%s466 + $0x14] sm:$0xf]
  %v473 = vld [vmem:[%s466 + $0x18] sm:$0xf]
  %v474 = vld [vmem:[%s466 + $0x1c] sm:$0xf]
  %v475 = vld [vmem:[%s466 + $0x20] sm:$0xf]
  %v476 = vld [vmem:[%s466 + $0x24] sm:$0xf]
  %v477 = vld [vmem:[%s466 + $0x28] sm:$0xf]
  %v478 = vld [vmem:[%s466 + $0x2c] sm:$0xf]
  %v479 = vld [vmem:[%s466 + $0x30] sm:$0xf]
  %v480 = vld [vmem:[%s466 + $0x34] sm:$0xf]
  %v481 = vld [vmem:[%s466 + $0x38] sm:$0xf]
  %v482 = vld [vmem:[%s466 + $0x3c] sm:$0xf]
  %v499 = vunpack.c.l.b16 %v467
  %v500 = vunpack.c.l.b16 %v468
  %v501 = vunpack.c.l.b16 %v469
  %v502 = vunpack.c.l.b16 %v470
  %v503 = vunpack.c.l.b16 %v471
  %v504 = vunpack.c.l.b16 %v472
  %v505 = vunpack.c.l.b16 %v473
  %v506 = vunpack.c.l.b16 %v474
  %v507 = vunpack.c.l.b16 %v475
  %v508 = vunpack.c.l.b16 %v476
  %v509 = vunpack.c.l.b16 %v477
  %v510 = vunpack.c.l.b16 %v478
  %v511 = vunpack.c.l.b16 %v479
  %v512 = vunpack.c.l.b16 %v480
  %v513 = vunpack.c.l.b16 %v481
  %v514 = vunpack.c.l.b16 %v482
  %v515 = vpack.c.b16 %v500, %v499
  %v516 = vpack.c.b16 %v502, %v501
  %v517 = vpack.c.b16 %v504, %v503
  %v518 = vpack.c.b16 %v506, %v505
  %v519 = vpack.c.b16 %v508, %v507
  %v520 = vpack.c.b16 %v510, %v509
  %v521 = vpack.c.b16 %v512, %v511
  %v522 = vpack.c.b16 %v514, %v513
  %531 = vmatpush.bf16.msra.mxu0 %v522
  %532 = vmatpush.bf16.msra.mxu0 %v521
  %533 = vmatpush.bf16.msra.mxu0 %v520
  %534 = vmatpush.bf16.msra.mxu0 %v519
  %535 = vmatpush.bf16.msra.mxu0 %v518
  %536 = vmatpush.bf16.msra.mxu0 %v517
  %537 = vmatpush.bf16.msra.mxu0 %v516
  %538 = vmatpush.bf16.msra.mxu0 %v515
  %539 = vmatmul.bf16.gmra.mxu0 %v464
  %v540 = vpop.f32.mrf.mxu0
  %v541 = vadd.f32 0.0, %v540
  %v542 = vpop.f32.mrf.mxu0
  %v543 = vadd.f32 0.0, %v542
  %544 = vmatmul.bf16.gmra.mxu0 %v465
  %v545 = vpop.f32.mrf.mxu0
  %v546 = vadd.f32 0.0, %v545
  %v547 = vpop.f32.mrf.mxu0
  %v548 = vadd.f32 0.0, %v547
  %549 = vdwg.mxu0
  %v566 = vunpack.c.l.b16 %v444
  %v567 = vunpack.c.l.b16 %v445
  %v568 = vunpack.c.l.b16 %v446
  %v569 = vunpack.c.l.b16 %v447
  %v570 = vunpack.c.l.b16 %v448
  %v571 = vunpack.c.l.b16 %v449
  %v572 = vunpack.c.l.b16 %v450
  %v573 = vunpack.c.l.b16 %v451
  %v574 = vunpack.c.l.b16 %v452
  %v575 = vunpack.c.l.b16 %v453
  %v576 = vunpack.c.l.b16 %v454
  %v577 = vunpack.c.l.b16 %v455
  %v578 = vunpack.c.l.b16 %v456
  %v579 = vunpack.c.l.b16 %v457
  %v580 = vunpack.c.l.b16 %v458
  %v581 = vunpack.c.l.b16 %v459
  %v582 = vpack.c.b16 %v567, %v566
  %v583 = vpack.c.b16 %v569, %v568
  %v584 = vpack.c.b16 %v571, %v570
  %v585 = vpack.c.b16 %v573, %v572
  %v586 = vpack.c.b16 %v575, %v574
  %v587 = vpack.c.b16 %v577, %v576
  %v588 = vpack.c.b16 %v579, %v578
  %v589 = vpack.c.b16 %v581, %v580
  %598 = vmatpush.bf16.msra.mxu0 %v589
  %599 = vmatpush.bf16.msra.mxu0 %v588
  %600 = vmatpush.bf16.msra.mxu0 %v587
  %601 = vmatpush.bf16.msra.mxu0 %v586
  %602 = vmatpush.bf16.msra.mxu0 %v585
  %603 = vmatpush.bf16.msra.mxu0 %v584
  %604 = vmatpush.bf16.msra.mxu0 %v583
  %605 = vmatpush.bf16.msra.mxu0 %v582
  %606 = vmatmul.bf16.gmra.mxu0 %v442
  %v607 = vpop.f32.mrf.mxu0
  %v608 = vadd.f32 %v541, %v607
  %v609 = vpop.f32.mrf.mxu0
  %v610 = vadd.f32 %v543, %v609
  %611 = vmatmul.bf16.gmra.mxu0 %v443
  %v612 = vpop.f32.mrf.mxu0
  %v613 = vadd.f32 %v546, %v612
  %v614 = vpop.f32.mrf.mxu0
  %v615 = vadd.f32 %v548, %v614
  %616 = vdwg.mxu0
  %v617 = vld [vmem:[#allocation2 + $0x2] sm:$0xff]
  %v618 = vld [vmem:[#allocation2 + $0xa] sm:$0xff]
  %v619 = vld [vmem:[#allocation2 + $0x1a] sm:$0xff]
  %v620 = vld [vmem:[#allocation2 + $0x22] sm:$0xff]
  %v621 = vpack.c.bf16 %v618, %v617
  %v622 = vpack.c.bf16 %v620, %v619
  %s623 = scalar_lea.vmem %s2, 128
  %v624 = vld [vmem:[%s623] sm:$0xf]
  %v625 = vld [vmem:[%s623 + $0x4] sm:$0xf]
  %v626 = vld [vmem:[%s623 + $0x8] sm:$0xf]
  %v627 = vld [vmem:[%s623 + $0xc] sm:$0xf]
  %v628 = vld [vmem:[%s623 + $0x10] sm:$0xf]
  %v629 = vld [vmem:[%s623 + $0x14] sm:$0xf]
  %v630 = vld [vmem:[%s623 + $0x18] sm:$0xf]
  %v631 = vld [vmem:[%s623 + $0x1c] sm:$0xf]
  %v632 = vld [vmem:[%s623 + $0x20] sm:$0xf]
  %v633 = vld [vmem:[%s623 + $0x24] sm:$0xf]
  %v634 = vld [vmem:[%s623 + $0x28] sm:$0xf]
  %v635 = vld [vmem:[%s623 + $0x2c] sm:$0xf]
  %v636 = vld [vmem:[%s623 + $0x30] sm:$0xf]
  %v637 = vld [vmem:[%s623 + $0x34] sm:$0xf]
  %v638 = vld [vmem:[%s623 + $0x38] sm:$0xf]
  %v639 = vld [vmem:[%s623 + $0x3c] sm:$0xf]
  %v656 = vunpack.c.l.b16 %v624
  %v657 = vunpack.c.l.b16 %v625
  %v658 = vunpack.c.l.b16 %v626
  %v659 = vunpack.c.l.b16 %v627
  %v660 = vunpack.c.l.b16 %v628
  %v661 = vunpack.c.l.b16 %v629
  %v662 = vunpack.c.l.b16 %v630
  %v663 = vunpack.c.l.b16 %v631
  %v664 = vunpack.c.l.b16 %v632
  %v665 = vunpack.c.l.b16 %v633
  %v666 = vunpack.c.l.b16 %v634
  %v667 = vunpack.c.l.b16 %v635
  %v668 = vunpack.c.l.b16 %v636
  %v669 = vunpack.c.l.b16 %v637
  %v670 = vunpack.c.l.b16 %v638
  %v671 = vunpack.c.l.b16 %v639
  %v672 = vpack.c.b16 %v657, %v656
  %v673 = vpack.c.b16 %v659, %v658
  %v674 = vpack.c.b16 %v661, %v660
  %v675 = vpack.c.b16 %v663, %v662
  %v676 = vpack.c.b16 %v665, %v664
  %v677 = vpack.c.b16 %v667, %v666
  %v678 = vpack.c.b16 %v669, %v668
  %v679 = vpack.c.b16 %v671, %v670
  %688 = vmatpush.bf16.msra.mxu0 %v679
  %689 = vmatpush.bf16.msra.mxu0 %v678
  %690 = vmatpush.bf16.msra.mxu0 %v677
  %691 = vmatpush.bf16.msra.mxu0 %v676
  %692 = vmatpush.bf16.msra.mxu0 %v675
  %693 = vmatpush.bf16.msra.mxu0 %v674
  %694 = vmatpush.bf16.msra.mxu0 %v673
  %695 = vmatpush.bf16.msra.mxu0 %v672
  %696 = vmatmul.bf16.gmra.mxu0 %v621
  %v697 = vpop.f32.mrf.mxu0
  %v698 = vadd.f32 0.0, %v697
  %v699 = vpop.f32.mrf.mxu0
  %v700 = vadd.f32 0.0, %v699
  %701 = vmatmul.bf16.gmra.mxu0 %v622
  %v702 = vpop.f32.mrf.mxu0
  %v703 = vadd.f32 0.0, %v702
  %v704 = vpop.f32.mrf.mxu0
  %v705 = vadd.f32 0.0, %v704
  %706 = vdwg.mxu0
  %v707 = vadd.f32 %v608, %v698
  %v708 = vadd.f32 %v610, %v700
  %v709 = vadd.f32 %v613, %v703
  %v710 = vadd.f32 %v615, %v705
  %v711 = vadd.f32 %v707, %v708
  %v712 = vadd.f32 %v711, %v709
  %v713 = vadd.f32 %v712, %v710
  %v714 = vrot.slane %v713, 4
  %v715 = vadd.f32 %v713, %v714
  %v716 = vrot.slane %v715, 2
  %v717 = vadd.f32 %v715, %v716
  %v718 = vrot.slane %v717, 1
  %v719 = vadd.f32 %v717, %v718
  %v720 = vmul.f32 %v707, %v707
  %v721 = vmul.f32 %v708, %v708
  %v722 = vmul.f32 %v709, %v709
  %v723 = vmul.f32 %v710, %v710
  %v724 = vadd.f32 %v720, %v721
  %v725 = vadd.f32 %v724, %v722
  %v726 = vadd.f32 %v725, %v723
  %v727 = vrot.slane %v726, 4
  %v728 = vadd.f32 %v726, %v727
  %v729 = vrot.slane %v728, 2
  %v730 = vadd.f32 %v728, %v729
  %v731 = vrot.slane %v730, 1
  %v732 = vadd.f32 %v730, %v731
  %v733 = vld [vmem:[%s3] sm:$0xff]
  %v734 = vld [vmem:[%s3 + $0x8] sm:$0xff]
  %v735 = vld [vmem:[%s3 + $0x10] sm:$0xff]
  %v736 = vld [vmem:[%s3 + $0x18] sm:$0xff]
  %v737 = vld [vmem:[%s3 + $0x20] sm:$0xff]
  %v738 = vld [vmem:[%s3 + $0x28] sm:$0xff]
  %v739 = vld [vmem:[%s3 + $0x30] sm:$0xff]
  %v740 = vld [vmem:[%s3 + $0x38] sm:$0xff]
  %v741 = vld [vmem:[%s3 + $0x40] sm:$0xff]
  %v742 = vld [vmem:[%s3 + $0x48] sm:$0xff]
  %v743 = vld [vmem:[%s3 + $0x50] sm:$0xff]
  %v744 = vld [vmem:[%s3 + $0x58] sm:$0xff]
  %v745 = vld [vmem:[%s3 + $0x60] sm:$0xff]
  %v746 = vld [vmem:[%s3 + $0x68] sm:$0xff]
  %v747 = vld [vmem:[%s3 + $0x70] sm:$0xff]
  %v748 = vld [vmem:[%s3 + $0x78] sm:$0xff]
  %749 = vmatpush.msra.mxu0 %v748
  %750 = vmatpush.msra.mxu0 %v747
  %751 = vmatpush.msra.mxu0 %v746
  %752 = vmatpush.msra.mxu0 %v745
  %753 = vmatpush.msra.mxu0 %v744
  %754 = vmatpush.msra.mxu0 %v743
  %755 = vmatpush.msra.mxu0 %v742
  %756 = vmatpush.msra.mxu0 %v741
  %757 = vmatpush.msra.mxu0 %v740
  %758 = vmatpush.msra.mxu0 %v739
  %759 = vmatpush.msra.mxu0 %v738
  %760 = vmatpush.msra.mxu0 %v737
  %761 = vmatpush.msra.mxu0 %v736
  %762 = vmatpush.msra.mxu0 %v735
  %763 = vmatpush.msra.mxu0 %v734
  %764 = vmatpush.msra.mxu0 %v733
  %765 = vmatmul.f32.gmra.mxu0 %v719
  %v766 = vpop.f32.mrf.mxu0
  %v767 = vadd.f32 0.0, %v766
  %768 = vdwg.mxu0
  %769 = vmatpush.msra.mxu0 %v748
  %770 = vmatpush.msra.mxu0 %v747
  %771 = vmatpush.msra.mxu0 %v746
  %772 = vmatpush.msra.mxu0 %v745
  %773 = vmatpush.msra.mxu0 %v744
  %774 = vmatpush.msra.mxu0 %v743
  %775 = vmatpush.msra.mxu0 %v742
  %776 = vmatpush.msra.mxu0 %v741
  %777 = vmatpush.msra.mxu0 %v740
  %778 = vmatpush.msra.mxu0 %v739
  %779 = vmatpush.msra.mxu0 %v738
  %780 = vmatpush.msra.mxu0 %v737
  %781 = vmatpush.msra.mxu0 %v736
  %782 = vmatpush.msra.mxu0 %v735
  %783 = vmatpush.msra.mxu0 %v734
  %784 = vmatpush.msra.mxu0 %v733
  %785 = vmatmul.f32.gmra.mxu0 %v732
  %v786 = vpop.f32.mrf.mxu0
  %v787 = vadd.f32 0.0, %v786
  %788 = vdwg.mxu0
  %v789 = vmul.f32 %v767, 0.001953125
  %v790 = vmul.f32 %v787, 0.001953125
  %v791 = vmul.f32 %v789, %v789
  %v792 = vsub.f32 %v790, %v791
  %v793 = vld [vmem:[%s6] sm:$0x1]
  %v794 = vadd.f32 %v792, 1e-05
  %v795 = vrsqrt.pop %v794
  %v796 = vmul.f32 %v795, %v794
  %v797 = vmul.f32 %v796, %v795
  %v798 = vmul.f32 0.5, %v797
  %v799 = vsub.f32 1.5, %v798
  %v800 = vmul.f32 %v795, %v799
  %vm801 = vweird.f32 %v794
  %vm802 = vweird.f32 %v795
  %vm803 = vmor %vm801, %vm802
  %v804 = vsel %vm803, %v795, %v800
  %v805 = vmul.f32 %v793, %v804
  %v806 = vld [vmem:[%s7] sm:$0x1]
  %v807 = vmul.f32 %v789, %v805
  %v808 = vsub.f32 %v806, %v807
  %v810 = vperm.slane %v805, 0
  %v812 = vmul.f32 %v707, %v810
  %v813 = vmul.f32 %v708, %v810
  %v814 = vmul.f32 %v709, %v810
  %v815 = vmul.f32 %v710, %v810
  %v817 = vperm.slane %v808, 0
  %v819 = vadd.f32 %v812, %v817
  %v820 = vadd.f32 %v813, %v817
  %v821 = vadd.f32 %v814, %v817
  %v822 = vadd.f32 %v815, %v817
  %v823 = vadd.f32 %v819, %v29
  %v824 = vadd.f32 %v820, %v30
  %v825 = vadd.f32 %v821, %v31
  %v826 = vadd.f32 %v822, %v32
  %v827 = vmax.f32 %v823, 0.0
  %v828 = vmax.f32 %v824, 0.0
  %v829 = vmax.f32 %v825, 0.0
  %v830 = vmax.f32 %v826, 0.0
  %831 = vst [vmem:[%s8] sm:$0xff] %v827
  %832 = vst [vmem:[%s8 + $0x8] sm:$0xff] %v828
  %833 = vst [vmem:[%s8 + $0x10] sm:$0xff] %v829
  %834 = vst [vmem:[%s8 + $0x18] sm:$0xff] %v830
  // Predicated region
  $region34: #{basic_block.1} parent=0 // pred_check
    _
  $region35: #{basic_block.1} parent=0 // pred_check_branch
    %836 = sbr.rel (0) target = $region37
  $region36: #{basic_block.1} parent=0 // pred_region
    _
  $region37: #{basic_block.1} parent=0 // pred_fallthru
    _
  // Predicated region
  $region38: #{basic_block.1} parent=0 // pred_check
    _
  $region39: #{basic_block.1} parent=0 // pred_check_branch
    %838 = sbr.rel (0) target = $region41
  $region40: #{basic_block.1} parent=0 // pred_region
    _
  $region41: #{basic_block.1} parent=0 // pred_fallthru
    _

</llo_original>
